<compile_context>
chip_gen: v7x
topology: tpu7x:2x2x1
jax: 0.10.0
libtpu: 0.0.40
codegen_flags: <defaults>
</compile_context>

<pallas_src>
import functools

import jax
import jax.numpy as jnp
from jax import lax
from jax.experimental import pallas as pl
from jax.experimental.pallas import tpu as pltpu

EPS = 1e-5


def _residual_block_kernel(
    x_ref,       # [Bp, Cp]   resident across the H grid
    w1_ref,      # [Cp, TH]   fc1 weight column tile
    g1_ref,      # [1, Hp]    batch_norm1 gamma (resident, sliced in-kernel)
    be1_ref,     # [1, Hp]    batch_norm1 beta  (resident, sliced in-kernel)
    w2_ref,      # [TH, Cp]   fc2 weight row tile
    g2_ref,      # [1, Cp]    batch_norm2 gamma
    be2_ref,     # [1, Cp]    batch_norm2 beta
    o_ref,       # [Bp, Cp]   output (resident)
    *scratch,    # [Bp, Cp]   f32 accumulator (only allocated when n_tiles > 1)
    n_valid,     # static: true (un-padded) batch size
    n_tiles,     # static: number of H tiles (grid size)
):
    k = pl.program_id(0)
    TH = w1_ref.shape[1]
    inv_n = 1.0 / n_valid  # static python float

    x = x_ref[...]

    # fc1 column block on the MXU (f32 accumulation).  Linear bias omitted:
    # it cancels exactly under the training-mode BN mean subtraction.
    h = jnp.dot(x, w1_ref[...], preferred_element_type=jnp.float32)

    # BN1 (training mode) for this column block.  Padded batch rows of h are
    # exactly zero (x pad rows are zero, no bias), so plain sums are exact;
    # single pass: var = E[h^2] - mean^2, clamped at 0 against cancellation.
    off = pl.multiple_of(k * TH, TH)
    g1 = g1_ref[:, pl.ds(off, TH)].astype(jnp.float32)
    be1 = be1_ref[:, pl.ds(off, TH)].astype(jnp.float32)

    s1 = jnp.sum(h, axis=0, keepdims=True)
    ss1 = jnp.sum(h * h, axis=0, keepdims=True)
    mean1 = s1 * inv_n
    var1 = jnp.maximum(ss1 * inv_n - mean1 * mean1, 0.0)
    scale1 = g1 * lax.rsqrt(var1 + EPS)
    shift1 = be1 - mean1 * scale1
    h = jnp.maximum(h * scale1 + shift1, 0.0)

    # fc2 partial product for this H tile (f32 accumulation on the MXU).
    part = jnp.dot(h.astype(w2_ref.dtype), w2_ref[...],
                   preferred_element_type=jnp.float32)

    def epilogue(y):
        # Mask padded batch rows out of the BN2 statistics only (their output
        # rows are sliced off by the wrapper).  Skipped when there is no pad.
        if n_valid == y.shape[0]:
            ym = y
        else:
            row = lax.broadcasted_iota(jnp.int32, (y.shape[0], 1), 0)
            ym = jnp.where(row < n_valid, y, 0.0)
        s2 = jnp.sum(ym, axis=0, keepdims=True)
        ss2 = jnp.sum(ym * ym, axis=0, keepdims=True)
        mean2 = s2 * inv_n
        var2 = jnp.maximum(ss2 * inv_n - mean2 * mean2, 0.0)
        scale2 = g2_ref[...].astype(jnp.float32) * lax.rsqrt(var2 + EPS)
        shift2 = be2_ref[...].astype(jnp.float32) - mean2 * scale2
        out = jnp.maximum(y * scale2 + shift2 + x.astype(jnp.float32), 0.0)
        o_ref[...] = out.astype(o_ref.dtype)

    if n_tiles == 1:
        # Single H tile: no accumulator traffic at all.
        epilogue(part)
    else:
        acc_ref = scratch[0]
        last = n_tiles - 1

        @pl.when(k == 0)
        def _():
            acc_ref[...] = part               # write, not zero-init + RMW

        @pl.when(jnp.logical_and(k > 0, k < last))
        def _():
            acc_ref[...] += part

        @pl.when(k == last)
        def _():
            epilogue(acc_ref[...] + part)     # no store+reload of acc in epilogue


def residual_block(x, params, *, hidden_tile=256, compute_dtype=None):
    """x: [B, C_in]; params: dict of fc/bn parameters.

    compute_dtype (e.g. jnp.bfloat16) casts x and the fc weights at the
    wrapper boundary — halves the HBM weight stream and uses the bf16 MXU
    path; BN statistics and the fc2 accumulator stay f32.
    """
    B, c_in = x.shape
    hidden = params["w1"].shape[1]
    cdt = jnp.dtype(compute_dtype) if compute_dtype is not None else x.dtype

    def round_up(n, m):
        return ((n + m - 1) // m) * m

    # Hidden tile: multiple of 128 (lane width), clamped to the padded hidden
    # size so small layers don't over-pad; default 256 fills the v6e/v7x MXU.
    TH = round_up(min(hidden_tile, round_up(hidden, 128)), 128)
    B_pad = round_up(B, 8)          # sublane multiple
    C_pad = round_up(c_in, 128)     # lane multiple -> unmasked full-width vst
    H_pad = round_up(hidden, TH)
    n_tiles = H_pad // TH

    # Zero-pad features / batch (exact: padded features stay 0 through the
    # whole block, padded rows are masked out of BN2 stats in the kernel).
    xp = jnp.pad(x.astype(cdt), ((0, B_pad - B), (0, C_pad - c_in)))
    w1 = jnp.pad(params["w1"].astype(cdt),
                 ((0, C_pad - c_in), (0, H_pad - hidden)))
    g1 = jnp.pad(params["gamma1"], ((0, 0), (0, H_pad - hidden)),
                 constant_values=1.0)
    be1 = jnp.pad(params["beta1"], ((0, 0), (0, H_pad - hidden)))
    w2 = jnp.pad(params["w2"].astype(cdt),
                 ((0, H_pad - hidden), (0, C_pad - c_in)))
    g2 = jnp.pad(params["gamma2"], ((0, 0), (0, C_pad - c_in)),
                 constant_values=1.0)
    be2 = jnp.pad(params["beta2"], ((0, 0), (0, C_pad - c_in)))

    kernel = functools.partial(_residual_block_kernel,
                               n_valid=B, n_tiles=n_tiles)

    # VMEM budget derived from the actual footprint (conservatively assuming
    # double-buffering of the resident blocks and the streamed weight tiles),
    # plus headroom for compiler scratch.  Keeps v7x's 64 MiB honest while not
    # over-reserving on v5e/v6e.
    isz = jnp.dtype(cdt).itemsize
    out_isz = jnp.dtype(x.dtype).itemsize
    bn_isz = jnp.dtype(g1.dtype).itemsize
    acc_bytes = B_pad * C_pad * 4 if n_tiles > 1 else 0
    footprint = (2 * B_pad * C_pad * isz                 # x (resident)
                 + 2 * B_pad * C_pad * out_isz           # out (resident)
                 + acc_bytes                             # f32 accumulator
                 + 2 * 2 * C_pad * TH * isz              # w1/w2 tiles, 2 buffers
                 + 4 * (H_pad + C_pad) * bn_isz)         # gamma/beta rows
    vmem_limit = int(min(max(footprint + (8 << 20), 32 << 20), 120 << 20))

    scratch_shapes = ([pltpu.VMEM((B_pad, C_pad), jnp.float32)]
                      if n_tiles > 1 else [])

    out = pl.pallas_call(
        kernel,
        out_shape=jax.ShapeDtypeStruct((B_pad, C_pad), x.dtype),
        grid_spec=pltpu.PrefetchScalarGridSpec(
            num_scalar_prefetch=0,
            grid=(n_tiles,),
            in_specs=[
                pl.BlockSpec((B_pad, C_pad), lambda k: (0, 0)),  # x (resident)
                pl.BlockSpec((C_pad, TH), lambda k: (0, k)),     # w1 tile
                pl.BlockSpec((1, H_pad), lambda k: (0, 0)),      # gamma1 (resident)
                pl.BlockSpec((1, H_pad), lambda k: (0, 0)),      # beta1  (resident)
                pl.BlockSpec((TH, C_pad), lambda k: (k, 0)),     # w2 tile
                pl.BlockSpec((1, C_pad), lambda k: (0, 0)),      # gamma2
                pl.BlockSpec((1, C_pad), lambda k: (0, 0)),      # beta2
            ],
            out_specs=pl.BlockSpec((B_pad, C_pad), lambda k: (0, 0)),
            scratch_shapes=scratch_shapes,
        ),
        compiler_params=pltpu.CompilerParams(
            dimension_semantics=("arbitrary",),  # H axis is a reduction
            vmem_limit_bytes=vmem_limit,
        ),
    )(xp, w1, g1, be1, w2, g2, be2)

    return out[:B, :c_in]


def init_params(key, in_channels, hidden_channels, dtype=jnp.float32):
    """Mirrors nn.Linear init (uniform +/- 1/sqrt(fan_in)) and nn.BatchNorm1d
    (gamma=1, beta=0). Linear weights stored as [in_features, out_features]."""
    k1, k2, k3, k4 = jax.random.split(key, 4)
    bound1 = 1.0 / jnp.sqrt(in_channels)
    bound2 = 1.0 / jnp.sqrt(hidden_channels)
    return {
        "w1": jax.random.uniform(k1, (in_channels, hidden_channels),
                                 jnp.float32, -bound1, bound1).astype(dtype),
        "b1": jax.random.uniform(k2, (1, hidden_channels),
                                 jnp.float32, -bound1, bound1).astype(dtype),
        "gamma1": jnp.ones((1, hidden_channels), dtype),
        "beta1": jnp.zeros((1, hidden_channels), dtype),
        "w2": jax.random.uniform(k3, (hidden_channels, in_channels),
                                 jnp.float32, -bound2, bound2).astype(dtype),
        "b2": jax.random.uniform(k4, (1, in_channels),
                                 jnp.float32, -bound2, bound2).astype(dtype),
        "gamma2": jnp.ones((1, in_channels), dtype),
        "beta2": jnp.zeros((1, in_channels), dtype),
    }


def residual_block_ref(x, params):
    """Pure-JAX reference of the PyTorch forward (training-mode batch norm,
    including the Linear biases — they cancel under the BN mean subtraction)."""
    h = x @ params["w1"] + params["b1"]
    m1 = jnp.mean(h, axis=0, keepdims=True)
    v1 = jnp.mean((h - m1) ** 2, axis=0, keepdims=True)
    h = (h - m1) / jnp.sqrt(v1 + EPS) * params["gamma1"] + params["beta1"]
    h = jnp.maximum(h, 0.0)
    y = h @ params["w2"] + params["b2"]
    m2 = jnp.mean(y, axis=0, keepdims=True)
    v2 = jnp.mean((y - m2) ** 2, axis=0, keepdims=True)
    y = (y - m2) / jnp.sqrt(v2 + EPS) * params["gamma2"] + params["beta2"]
    return jnp.maximum(y + x, 0.0)


if __name__ == "__main__":
    key = jax.random.PRNGKey(0)
    kx, kp = jax.random.split(key)

    batch = 128            # real M dimension for the MXU (larger B per call
                           # is the main remaining lever — the kernel is
                           # HBM-weight-bound below B ~ a few hundred rows)
    in_channels = 32       # padded to 128 lanes inside the wrapper
    hidden_channels = 64   # padded to one 128-wide H tile inside the wrapper

    x = jax.random.normal(kx, (batch, in_channels), jnp.float32)
    params = init_params(kp, in_channels, hidden_channels)
    ref = residual_block_ref(x, params)

    # f32 path: tight correctness check against the pure-JAX reference.
    out = jax.block_until_ready(residual_block(x, params))
    assert out.shape == (batch, in_channels)
    assert jnp.allclose(out, ref, atol=1e-4, rtol=1e-4), "f32 mismatch vs reference"

    # bf16 compute path (halved weight/activation stream, bf16 MXU on v6e/v7x);
    # BN stats and the accumulator remain f32, so only bf16 rounding remains.
    out_bf16 = jax.block_until_ready(
        residual_block(x, params, compute_dtype=jnp.bfloat16))
    assert out_bf16.shape == (batch, in_channels)
    assert jnp.allclose(out_bf16.astype(jnp.float32), ref,
                        atol=1e-1, rtol=1e-1), "bf16 mismatch vs reference"

    print("KERNEL_OK")
</pallas_src>

<mosaic_0001>
module attributes {stable_mosaic.version = 11 : i64} {
  func.func @_residual_block_kernel(%arg0: i32, %arg1: memref<128x128xf32, #tpu.memory_space<vmem>>, %arg2: memref<128x128xf32, #tpu.memory_space<vmem>>, %arg3: memref<1x128xf32, #tpu.memory_space<vmem>>, %arg4: memref<1x128xf32, #tpu.memory_space<vmem>>, %arg5: memref<128x128xf32, #tpu.memory_space<vmem>>, %arg6: memref<1x128xf32, #tpu.memory_space<vmem>>, %arg7: memref<1x128xf32, #tpu.memory_space<vmem>>, %arg8: memref<128x128xf32, #tpu.memory_space<vmem>>) attributes {dimension_semantics = [#tpu.dimension_semantics<arbitrary>], iteration_bounds = array<i64: 1>, scalar_prefetch = 0 : i64, scratch_operands = 0 : i64, tpu.core_type = #tpu.core_type<tc>, window_params = [{pipeline_mode = #tpu.pipeline_mode<synchronous>, transform_indices = @transform_0, window_bounds = array<i64: 128, 128>}, {transform_indices = @transform_1, window_bounds = array<i64: 128, 128>}, {pipeline_mode = #tpu.pipeline_mode<synchronous>, transform_indices = @transform_2, window_bounds = array<i64: 1, 128>}, {pipeline_mode = #tpu.pipeline_mode<synchronous>, transform_indices = @transform_3, window_bounds = array<i64: 1, 128>}, {transform_indices = @transform_4, window_bounds = array<i64: 128, 128>}, {pipeline_mode = #tpu.pipeline_mode<synchronous>, transform_indices = @transform_5, window_bounds = array<i64: 1, 128>}, {pipeline_mode = #tpu.pipeline_mode<synchronous>, transform_indices = @transform_6, window_bounds = array<i64: 1, 128>}, {pipeline_mode = #tpu.pipeline_mode<synchronous>, transform_indices = @transform_7, window_bounds = array<i64: 128, 128>}]} {
    %c0 = arith.constant 0 : index
    %c0_0 = arith.constant 0 : index
    %0 = vector.load %arg1[%c0, %c0_0] : memref<128x128xf32, #tpu.memory_space<vmem>>, vector<128x128xf32>
    %c0_1 = arith.constant 0 : index
    %c0_2 = arith.constant 0 : index
    %1 = vector.load %arg2[%c0_1, %c0_2] : memref<128x128xf32, #tpu.memory_space<vmem>>, vector<128x128xf32>
    %cst = arith.constant dense<0.000000e+00> : vector<128x128xf32>
    %2 = tpu.matmul %0, %1, %cst {dimension_numbers = #tpu.dot_dimension_numbers<[1], [0], [0], [1], [0, 0, 1, 1], [], []>} : vector<128x128xf32>, vector<128x128xf32>, vector<128x128xf32> -> vector<128x128xf32>
    %c128_i32 = arith.constant 128 : i32
    %3 = arith.muli %arg0, %c128_i32 : i32
    %4 = tpu.assume_multiple %3, 128 : i32
    %c0_3 = arith.constant 0 : index
    %5 = arith.index_cast %4 : i32 to index
    %6 = vector.load %arg3[%c0_3, %5] : memref<1x128xf32, #tpu.memory_space<vmem>>, vector<1x128xf32>
    %c0_4 = arith.constant 0 : index
    %7 = arith.index_cast %4 : i32 to index
    %8 = vector.load %arg4[%c0_4, %7] : memref<1x128xf32, #tpu.memory_space<vmem>>, vector<1x128xf32>
    %cst_5 = arith.constant dense<0.000000e+00> : vector<128xf32>
    %9 = vector.multi_reduction <add>, %2, %cst_5 [0] : vector<128x128xf32> to vector<128xf32>
    %10 = vector.shape_cast %9 : vector<128xf32> to vector<1x128xf32>
    %11 = arith.mulf %2, %2 : vector<128x128xf32>
    %cst_6 = arith.constant dense<0.000000e+00> : vector<128xf32>
    %12 = vector.multi_reduction <add>, %11, %cst_6 [0] : vector<128x128xf32> to vector<128xf32>
    %13 = vector.shape_cast %12 : vector<128xf32> to vector<1x128xf32>
    %cst_7 = arith.constant 7.812500e-03 : f32
    %14 = vector.broadcast %cst_7 : f32 to vector<1x128xf32>
    %15 = arith.mulf %10, %14 : vector<1x128xf32>
    %cst_8 = arith.constant 7.812500e-03 : f32
    %16 = vector.broadcast %cst_8 : f32 to vector<1x128xf32>
    %17 = arith.mulf %13, %16 : vector<1x128xf32>
    %18 = arith.mulf %15, %15 : vector<1x128xf32>
    %19 = arith.subf %17, %18 : vector<1x128xf32>
    %cst_9 = arith.constant 0.000000e+00 : f32
    %20 = vector.broadcast %cst_9 : f32 to vector<1x128xf32>
    %21 = arith.maximumf %19, %20 : vector<1x128xf32>
    %cst_10 = arith.constant 9.99999974E-6 : f32
    %22 = vector.broadcast %cst_10 : f32 to vector<1x128xf32>
    %23 = arith.addf %21, %22 : vector<1x128xf32>
    %24 = math.rsqrt %23 : vector<1x128xf32>
    %25 = arith.mulf %6, %24 : vector<1x128xf32>
    %26 = arith.mulf %15, %25 : vector<1x128xf32>
    %27 = arith.subf %8, %26 : vector<1x128xf32>
    %28 = vector.broadcast %25 : vector<1x128xf32> to vector<128x128xf32>
    %29 = arith.mulf %2, %28 : vector<128x128xf32>
    %30 = vector.broadcast %27 : vector<1x128xf32> to vector<128x128xf32>
    %31 = arith.addf %29, %30 : vector<128x128xf32>
    %cst_11 = arith.constant 0.000000e+00 : f32
    %32 = vector.broadcast %cst_11 : f32 to vector<128x128xf32>
    %33 = arith.maximumf %31, %32 : vector<128x128xf32>
    %c0_12 = arith.constant 0 : index
    %c0_13 = arith.constant 0 : index
    %34 = vector.load %arg5[%c0_12, %c0_13] : memref<128x128xf32, #tpu.memory_space<vmem>>, vector<128x128xf32>
    %cst_14 = arith.constant dense<0.000000e+00> : vector<128x128xf32>
    %35 = tpu.matmul %33, %34, %cst_14 {dimension_numbers = #tpu.dot_dimension_numbers<[1], [0], [0], [1], [0, 0, 1, 1], [], []>} : vector<128x128xf32>, vector<128x128xf32>, vector<128x128xf32> -> vector<128x128xf32>
    %cst_15 = arith.constant dense<0.000000e+00> : vector<128xf32>
    %36 = vector.multi_reduction <add>, %35, %cst_15 [0] : vector<128x128xf32> to vector<128xf32>
    %37 = vector.shape_cast %36 : vector<128xf32> to vector<1x128xf32>
    %38 = arith.mulf %35, %35 : vector<128x128xf32>
    %cst_16 = arith.constant dense<0.000000e+00> : vector<128xf32>
    %39 = vector.multi_reduction <add>, %38, %cst_16 [0] : vector<128x128xf32> to vector<128xf32>
    %40 = vector.shape_cast %39 : vector<128xf32> to vector<1x128xf32>
    %cst_17 = arith.constant 7.812500e-03 : f32
    %41 = vector.broadcast %cst_17 : f32 to vector<1x128xf32>
    %42 = arith.mulf %37, %41 : vector<1x128xf32>
    %cst_18 = arith.constant 7.812500e-03 : f32
    %43 = vector.broadcast %cst_18 : f32 to vector<1x128xf32>
    %44 = arith.mulf %40, %43 : vector<1x128xf32>
    %45 = arith.mulf %42, %42 : vector<1x128xf32>
    %46 = arith.subf %44, %45 : vector<1x128xf32>
    %cst_19 = arith.constant 0.000000e+00 : f32
    %47 = vector.broadcast %cst_19 : f32 to vector<1x128xf32>
    %48 = arith.maximumf %46, %47 : vector<1x128xf32>
    %c0_20 = arith.constant 0 : index
    %c0_21 = arith.constant 0 : index
    %49 = vector.load %arg6[%c0_20, %c0_21] : memref<1x128xf32, #tpu.memory_space<vmem>>, vector<1x128xf32>
    %cst_22 = arith.constant 9.99999974E-6 : f32
    %50 = vector.broadcast %cst_22 : f32 to vector<1x128xf32>
    %51 = arith.addf %48, %50 : vector<1x128xf32>
    %52 = math.rsqrt %51 : vector<1x128xf32>
    %53 = arith.mulf %49, %52 : vector<1x128xf32>
    %c0_23 = arith.constant 0 : index
    %c0_24 = arith.constant 0 : index
    %54 = vector.load %arg7[%c0_23, %c0_24] : memref<1x128xf32, #tpu.memory_space<vmem>>, vector<1x128xf32>
    %55 = arith.mulf %42, %53 : vector<1x128xf32>
    %56 = arith.subf %54, %55 : vector<1x128xf32>
    %57 = vector.broadcast %53 : vector<1x128xf32> to vector<128x128xf32>
    %58 = arith.mulf %35, %57 : vector<128x128xf32>
    %59 = vector.broadcast %56 : vector<1x128xf32> to vector<128x128xf32>
    %60 = arith.addf %58, %59 : vector<128x128xf32>
    %61 = arith.addf %60, %0 : vector<128x128xf32>
    %cst_25 = arith.constant 0.000000e+00 : f32
    %62 = vector.broadcast %cst_25 : f32 to vector<128x128xf32>
    %63 = arith.maximumf %61, %62 : vector<128x128xf32>
    %c0_26 = arith.constant 0 : index
    %c0_27 = arith.constant 0 : index
    %64 = vector.load %arg8[%c0_26, %c0_27] : memref<128x128xf32, #tpu.memory_space<vmem>>, vector<128x128xf32>
    tpu.vector_store %arg8[%c0_26, %c0_27], %63 {strides = array<i32>} : memref<128x128xf32, #tpu.memory_space<vmem>>, vector<128x128xf32>,
    return
  }
  func.func @transform_0(%arg0: i32) -> (i32, i32) {
    %c0_i32 = arith.constant 0 : i32
    %c0_i32_0 = arith.constant 0 : i32
    %c0_i32_1 = arith.constant 0 : i32
    return %c0_i32, %c0_i32_0 : i32, i32
  }
  func.func @transform_1(%arg0: i32) -> (i32, i32) {
    %c0_i32 = arith.constant 0 : i32
    %c0_i32_0 = arith.constant 0 : i32
    return %c0_i32, %arg0 : i32, i32
  }
  func.func @transform_2(%arg0: i32) -> (i32, i32) {
    %c0_i32 = arith.constant 0 : i32
    %c0_i32_0 = arith.constant 0 : i32
    %c0_i32_1 = arith.constant 0 : i32
    return %c0_i32, %c0_i32_0 : i32, i32
  }
  func.func @transform_3(%arg0: i32) -> (i32, i32) {
    %c0_i32 = arith.constant 0 : i32
    %c0_i32_0 = arith.constant 0 : i32
    %c0_i32_1 = arith.constant 0 : i32
    return %c0_i32, %c0_i32_0 : i32, i32
  }
  func.func @transform_4(%arg0: i32) -> (i32, i32) {
    %c0_i32 = arith.constant 0 : i32
    %c0_i32_0 = arith.constant 0 : i32
    return %arg0, %c0_i32 : i32, i32
  }
  func.func @transform_5(%arg0: i32) -> (i32, i32) {
    %c0_i32 = arith.constant 0 : i32
    %c0_i32_0 = arith.constant 0 : i32
    %c0_i32_1 = arith.constant 0 : i32
    return %c0_i32, %c0_i32_0 : i32, i32
  }
  func.func @transform_6(%arg0: i32) -> (i32, i32) {
    %c0_i32 = arith.constant 0 : i32
    %c0_i32_0 = arith.constant 0 : i32
    %c0_i32_1 = arith.constant 0 : i32
    return %c0_i32, %c0_i32_0 : i32, i32
  }
  func.func @transform_7(%arg0: i32) -> (i32, i32) {
    %c0_i32 = arith.constant 0 : i32
    %c0_i32_0 = arith.constant 0 : i32
    %c0_i32_1 = arith.constant 0 : i32
    return %c0_i32, %c0_i32_0 : i32, i32
  }
}

</mosaic_0001>

<llo_original>
// kernel: tpu_custom_call.1
$region0: #{tpu_custom_call.1}
  #allocation0 [shape = 'u32[]', space=smem, size = 0x4, offset = 0x4, fixed_abs, tag = 'smem constant byte address 0x4 - core index']
  #allocation1 [shape = 'u32[144,128]{1,0:T(1,128)}', space=vmem, size = 0x12000, scoped, tag = 'internal scratch']
  %s0 = inlined_call_operand.hbm [shape: f32[128,128], index: 0, kind: input, shape index: {}]
  %s1 = inlined_call_operand.hbm [shape: f32[128,128], index: 1, kind: input, shape index: {}]
  %s2 = inlined_call_operand.vmem [shape: f32[1,128], index: 2, kind: input, shape index: {}]
  %s3 = inlined_call_operand.vmem [shape: f32[1,128], index: 3, kind: input, shape index: {}]
  %s4 = inlined_call_operand.hbm [shape: f32[128,128], index: 4, kind: input, shape index: {}]
  %s5 = inlined_call_operand.vmem [shape: f32[1,128], index: 5, kind: input, shape index: {}]
  %s6 = inlined_call_operand.vmem [shape: f32[1,128], index: 6, kind: input, shape index: {}]
  %s7 = inlined_call_operand.hbm [shape: f32[128,128], index: 7, kind: output, shape index: {}]
  %s8 = sld [smem:[#allocation0]]
  $region50: #{tpu_custom_call.1} parent=0
    _
  %s10 = ssub.s32 1, %s8
  %s11 = scalar_select 0, %s10, %s8
  $region1: #{tpu_custom_call.1} parent=0
    #allocation2 [shape = 'u8[65536]{0}', space=vmem, size = 0x10000, scoped, tag = 'input window, operand 0, single buffered']
    #allocation3 [shape = 's32[1]{0}', space=sflag, size = 0x4, scoped, tag = 'scoped memory for tpu_custom_call.1']
    #allocation4 [shape = 's32[1]{0}', space=sflag, size = 0x4, scoped, tag = 'scoped memory for tpu_custom_call.1']
    #allocation5 [shape = 'u8[65536]{0}', space=vmem, size = 0x10000, scoped, tag = 'input window, operand 1, single buffered']
    #allocation6 [shape = 's32[1]{0}', space=sflag, size = 0x4, scoped, tag = 'scoped memory for tpu_custom_call.1']
    #allocation7 [shape = 'u8[65536]{0}', space=vmem, size = 0x10000, scoped, tag = 'input window, operand 4, single buffered']
    #allocation8 [shape = 'u8[65536]{0}', space=vmem, size = 0x10000, scoped, tag = 'output window, operand 0, single buffered']
    %12 = vsyncpa [#allocation3], 0
    %13 = vsyncpa [#allocation6], 0
    %14 = vsyncpa [#allocation4], 0
    // Predicated region
    $region2: #{tpu_custom_call.1} parent=1 // pred_check
      _
    $region3: #{tpu_custom_call.1} parent=1 // pred_check_branch
      %16 = sbr.rel (0) target = $region5
    $region4: #{tpu_custom_call.1} parent=1 // pred_region
      %s18 = ssub.s32 2048, 2048
      %19 = vsyncadd [#allocation3], %s18
      %s20 = sshll.u32 [#allocation2], 4
      %s21 = int_to_ptr.vmem [resolvable:$true] %s20
      %26 = dma.hbm_to_vmem [thread:$0]  %s0, 2048, %s21, [#allocation3], 128, 128, 8
    $region5: #{tpu_custom_call.1} parent=1 // pred_fallthru
      _
    // Predicated region
    $region6: #{tpu_custom_call.1} parent=1 // pred_check
      _
    $region7: #{tpu_custom_call.1} parent=1 // pred_check_branch
      %28 = sbr.rel (0) target = $region9
    $region8: #{tpu_custom_call.1} parent=1 // pred_region
      %s30 = ssub.s32 2048, 2048
      %31 = vsyncadd [#allocation6], %s30
      %s32 = sshll.u32 [#allocation5], 4
      %s33 = int_to_ptr.vmem [resolvable:$true] %s32
      %38 = dma.hbm_to_vmem [thread:$0]  %s1, 2048, %s33, [#allocation6], 128, 128, 8
    $region9: #{tpu_custom_call.1} parent=1 // pred_fallthru
      _
    // Predicated region
    $region10: #{tpu_custom_call.1} parent=1 // pred_check
      _
    $region11: #{tpu_custom_call.1} parent=1 // pred_check_branch
      %40 = sbr.rel (0) target = $region13
    $region12: #{tpu_custom_call.1} parent=1 // pred_region
      _
    $region13: #{tpu_custom_call.1} parent=1 // pred_fallthru
      _
    // Predicated region
    $region14: #{tpu_custom_call.1} parent=1 // pred_check
      _
    $region15: #{tpu_custom_call.1} parent=1 // pred_check_branch
      %42 = sbr.rel (0) target = $region17
    $region16: #{tpu_custom_call.1} parent=1 // pred_region
      _
    $region17: #{tpu_custom_call.1} parent=1 // pred_fallthru
      _
    // Predicated region
    $region18: #{tpu_custom_call.1} parent=1 // pred_check
      _
    $region19: #{tpu_custom_call.1} parent=1 // pred_check_branch
      %44 = sbr.rel (0) target = $region21
    $region20: #{tpu_custom_call.1} parent=1 // pred_region
      %s46 = ssub.s32 2048, 2048
      %47 = vsyncadd [#allocation6], %s46
      %s48 = sshll.u32 [#allocation7], 4
      %s49 = int_to_ptr.vmem [resolvable:$true] %s48
      %54 = dma.hbm_to_vmem [thread:$0]  %s4, 2048, %s49, [#allocation6], 128, 128, 8
    $region21: #{tpu_custom_call.1} parent=1 // pred_fallthru
      _
    // Predicated region
    $region22: #{tpu_custom_call.1} parent=1 // pred_check
      _
    $region23: #{tpu_custom_call.1} parent=1 // pred_check_branch
      %56 = sbr.rel (0) target = $region25
    $region24: #{tpu_custom_call.1} parent=1 // pred_region
      _
    $region25: #{tpu_custom_call.1} parent=1 // pred_fallthru
      _
    // Predicated region
    $region26: #{tpu_custom_call.1} parent=1 // pred_check
      _
    $region27: #{tpu_custom_call.1} parent=1 // pred_check_branch
      %58 = sbr.rel (0) target = $region29
    $region28: #{tpu_custom_call.1} parent=1 // pred_region
      _
    $region29: #{tpu_custom_call.1} parent=1 // pred_fallthru
      _
    // Predicated region
    $region30: #{tpu_custom_call.1} parent=1 // pred_check
      _
    $region31: #{tpu_custom_call.1} parent=1 // pred_check_branch
      %60 = sbr.rel (0) target = $region33
    $region32: #{tpu_custom_call.1} parent=1 // pred_region
      %61 = dma.done [#allocation3], 2048
    $region33: #{tpu_custom_call.1} parent=1 // pred_fallthru
      _
    // Predicated region
    $region34: #{tpu_custom_call.1} parent=1 // pred_check
      _
    $region35: #{tpu_custom_call.1} parent=1 // pred_check_branch
      %63 = sbr.rel (0) target = $region37
    $region36: #{tpu_custom_call.1} parent=1 // pred_region
      %64 = dma.done [#allocation6], 2048
    $region37: #{tpu_custom_call.1} parent=1 // pred_fallthru
      _
    // Predicated region
    $region38: #{tpu_custom_call.1} parent=1 // pred_check
      _
    $region39: #{tpu_custom_call.1} parent=1 // pred_check_branch
      %66 = sbr.rel (0) target = $region41
    $region40: #{tpu_custom_call.1} parent=1 // pred_region
      %67 = dma.done [#allocation6], 2048
    $region41: #{tpu_custom_call.1} parent=1 // pred_fallthru
      _
    %v68 = vld [vmem:[#allocation2] sm:$0xff]
    %v69 = vld [vmem:[#allocation2 + $0x8] sm:$0xff]
    %v70 = vld [vmem:[#allocation2 + $0x10] sm:$0xff]
    %v71 = vld [vmem:[#allocation2 + $0x18] sm:$0xff]
    %v72 = vld [vmem:[#allocation2 + $0x20] sm:$0xff]
    %v73 = vld [vmem:[#allocation2 + $0x28] sm:$0xff]
    %v74 = vld [vmem:[#allocation2 + $0x30] sm:$0xff]
    %v75 = vld [vmem:[#allocation2 + $0x38] sm:$0xff]
    %v76 = vld [vmem:[#allocation2 + $0x40] sm:$0xff]
    %v77 = vld [vmem:[#allocation2 + $0x48] sm:$0xff]
    %v78 = vld [vmem:[#allocation2 + $0x50] sm:$0xff]
    %v79 = vld [vmem:[#allocation2 + $0x58] sm:$0xff]
    %v80 = vld [vmem:[#allocation2 + $0x60] sm:$0xff]
    %v81 = vld [vmem:[#allocation2 + $0x68] sm:$0xff]
    %v82 = vld [vmem:[#allocation2 + $0x70] sm:$0xff]
    %v83 = vld [vmem:[#allocation2 + $0x78] sm:$0xff]
    %v84 = vld [vmem:[#allocation5] sm:$0xff]
    %v85 = vld [vmem:[#allocation5 + $0x8] sm:$0xff]
    %v86 = vld [vmem:[#allocation5 + $0x10] sm:$0xff]
    %v87 = vld [vmem:[#allocation5 + $0x18] sm:$0xff]
    %v88 = vld [vmem:[#allocation5 + $0x20] sm:$0xff]
    %v89 = vld [vmem:[#allocation5 + $0x28] sm:$0xff]
    %v90 = vld [vmem:[#allocation5 + $0x30] sm:$0xff]
    %v91 = vld [vmem:[#allocation5 + $0x38] sm:$0xff]
    %v92 = vld [vmem:[#allocation5 + $0x40] sm:$0xff]
    %v93 = vld [vmem:[#allocation5 + $0x48] sm:$0xff]
    %v94 = vld [vmem:[#allocation5 + $0x50] sm:$0xff]
    %v95 = vld [vmem:[#allocation5 + $0x58] sm:$0xff]
    %v96 = vld [vmem:[#allocation5 + $0x60] sm:$0xff]
    %v97 = vld [vmem:[#allocation5 + $0x68] sm:$0xff]
    %v98 = vld [vmem:[#allocation5 + $0x70] sm:$0xff]
    %v99 = vld [vmem:[#allocation5 + $0x78] sm:$0xff]
    %100 = vmatprep.subr.mxu0 0.0
    %101 = vmatpush1.msra.mxu0 %v84
    %102 = vmatprep.subr.mxu0 0.0
    %103 = vmatpush1.msra.mxu0 %v85
    %104 = vmatprep.subr.mxu0 0.0
    %105 = vmatpush1.msra.mxu0 %v86
    %106 = vmatprep.subr.mxu0 0.0
    %107 = vmatpush1.msra.mxu0 %v87
    %108 = vmatprep.subr.mxu0 0.0
    %109 = vmatpush1.msra.mxu0 %v88
    %110 = vmatprep.subr.mxu0 0.0
    %111 = vmatpush1.msra.mxu0 %v89
    %112 = vmatprep.subr.mxu0 0.0
    %113 = vmatpush1.msra.mxu0 %v90
    %114 = vmatprep.subr.mxu0 0.0
    %115 = vmatpush1.msra.mxu0 %v91
    %116 = vmatprep.subr.mxu0 0.0
    %117 = vmatpush1.msra.mxu0 %v92
    %118 = vmatprep.subr.mxu0 0.0
    %119 = vmatpush1.msra.mxu0 %v93
    %120 = vmatprep.subr.mxu0 0.0
    %121 = vmatpush1.msra.mxu0 %v94
    %122 = vmatprep.subr.mxu0 0.0
    %123 = vmatpush1.msra.mxu0 %v95
    %124 = vmatprep.subr.mxu0 0.0
    %125 = vmatpush1.msra.mxu0 %v96
    %126 = vmatprep.subr.mxu0 0.0
    %127 = vmatpush1.msra.mxu0 %v97
    %128 = vmatprep.subr.mxu0 0.0
    %129 = vmatpush1.msra.mxu0 %v98
    %130 = vmatprep.subr.mxu0 0.0
    %131 = vmatpush1.msra.mxu0 %v99
    %132 = vmatprep.subr.mxu0 0.0
    %133 = vmatpush1.msra.mxu0 0.0
    %134 = vmatprep.subr.mxu0 0.0
    %135 = vmatpush1.msra.mxu0 0.0
    %136 = vmatprep.subr.mxu0 0.0
    %137 = vmatpush1.msra.mxu0 0.0
    %138 = vmatprep.subr.mxu0 0.0
    %139 = vmatpush1.msra.mxu0 0.0
    %140 = vmatprep.subr.mxu0 0.0
    %141 = vmatpush1.msra.mxu0 0.0
    %142 = vmatprep.subr.mxu0 0.0
    %143 = vmatpush1.msra.mxu0 0.0
    %144 = vmatprep.subr.mxu0 0.0
    %145 = vmatpush1.msra.mxu0 0.0
    %146 = vmatprep.subr.mxu0 0.0
    %147 = vmatpush1.msra.mxu0 0.0
    %148 = vmatprep.subr.mxu0 0.0
    %149 = vmatpush1.msra.mxu0 0.0
    %150 = vmatprep.subr.mxu0 0.0
    %151 = vmatpush1.msra.mxu0 0.0
    %152 = vmatprep.subr.mxu0 0.0
    %153 = vmatpush1.msra.mxu0 0.0
    %154 = vmatprep.subr.mxu0 0.0
    %155 = vmatpush1.msra.mxu0 0.0
    %156 = vmatprep.subr.mxu0 0.0
    %157 = vmatpush1.msra.mxu0 0.0
    %158 = vmatprep.subr.mxu0 0.0
    %159 = vmatpush1.msra.mxu0 0.0
    %160 = vmatprep.subr.mxu0 0.0
    %161 = vmatpush1.msra.mxu0 0.0
    %162 = vmatprep.subr.mxu0 0.0
    %163 = vmatpush1.msra.mxu0 0.0
    %164 = vmatprep.mubr.f32.mxu0 0.0
    %165 = vmatmul.mubr.f32.gmra.mrb[0].mxu0 %v68
    %v166 = vpop.f32.mrb[0].mxu0
    %v167 = vadd.f32 0.0, %v166
    %v168 = vpop.f32.mrb[0].mxu0
    %169 = vmatprep.mubr.f32.mxu0 0.0
    %170 = vmatmul.mubr.f32.gmra.mrb[0].mxu0 %v69
    %v171 = vpop.f32.mrb[0].mxu0
    %v172 = vadd.f32 0.0, %v171
    %v173 = vpop.f32.mrb[0].mxu0
    %174 = vmatprep.mubr.f32.mxu0 0.0
    %175 = vmatmul.mubr.f32.gmra.mrb[0].mxu0 %v70
    %v176 = vpop.f32.mrb[0].mxu0
    %v177 = vadd.f32 0.0, %v176
    %v178 = vpop.f32.mrb[0].mxu0
    %179 = vmatprep.mubr.f32.mxu0 0.0
    %180 = vmatmul.mubr.f32.gmra.mrb[0].mxu0 %v71
    %v181 = vpop.f32.mrb[0].mxu0
    %v182 = vadd.f32 0.0, %v181
    %v183 = vpop.f32.mrb[0].mxu0
    %184 = vmatprep.mubr.f32.mxu0 0.0
    %185 = vmatmul.mubr.f32.gmra.mrb[0].mxu0 %v72
    %v186 = vpop.f32.mrb[0].mxu0
    %v187 = vadd.f32 0.0, %v186
    %v188 = vpop.f32.mrb[0].mxu0
    %189 = vmatprep.mubr.f32.mxu0 0.0
    %190 = vmatmul.mubr.f32.gmra.mrb[0].mxu0 %v73
    %v191 = vpop.f32.mrb[0].mxu0
    %v192 = vadd.f32 0.0, %v191
    %v193 = vpop.f32.mrb[0].mxu0
    %194 = vmatprep.mubr.f32.mxu0 0.0
    %195 = vmatmul.mubr.f32.gmra.mrb[0].mxu0 %v74
    %v196 = vpop.f32.mrb[0].mxu0
    %v197 = vadd.f32 0.0, %v196
    %v198 = vpop.f32.mrb[0].mxu0
    %199 = vmatprep.mubr.f32.mxu0 0.0
    %200 = vmatmul.mubr.f32.gmra.mrb[0].mxu0 %v75
    %v201 = vpop.f32.mrb[0].mxu0
    %v202 = vadd.f32 0.0, %v201
    %v203 = vpop.f32.mrb[0].mxu0
    %204 = vmatprep.mubr.f32.mxu0 0.0
    %205 = vmatmul.mubr.f32.gmra.mrb[0].mxu0 %v76
    %v206 = vpop.f32.mrb[0].mxu0
    %v207 = vadd.f32 0.0, %v206
    %v208 = vpop.f32.mrb[0].mxu0
    %209 = vmatprep.mubr.f32.mxu0 0.0
    %210 = vmatmul.mubr.f32.gmra.mrb[0].mxu0 %v77
    %v211 = vpop.f32.mrb[0].mxu0
    %v212 = vadd.f32 0.0, %v211
    %v213 = vpop.f32.mrb[0].mxu0
    %214 = vmatprep.mubr.f32.mxu0 0.0
    %215 = vmatmul.mubr.f32.gmra.mrb[0].mxu0 %v78
    %v216 = vpop.f32.mrb[0].mxu0
    %v217 = vadd.f32 0.0, %v216
    %v218 = vpop.f32.mrb[0].mxu0
    %219 = vmatprep.mubr.f32.mxu0 0.0
    %220 = vmatmul.mubr.f32.gmra.mrb[0].mxu0 %v79
    %v221 = vpop.f32.mrb[0].mxu0
    %v222 = vadd.f32 0.0, %v221
    %v223 = vpop.f32.mrb[0].mxu0
    %224 = vmatprep.mubr.f32.mxu0 0.0
    %225 = vmatmul.mubr.f32.gmra.mrb[0].mxu0 %v80
    %v226 = vpop.f32.mrb[0].mxu0
    %v227 = vadd.f32 0.0, %v226
    %v228 = vpop.f32.mrb[0].mxu0
    %229 = vmatprep.mubr.f32.mxu0 0.0
    %230 = vmatmul.mubr.f32.gmra.mrb[0].mxu0 %v81
    %v231 = vpop.f32.mrb[0].mxu0
    %v232 = vadd.f32 0.0, %v231
    %v233 = vpop.f32.mrb[0].mxu0
    %234 = vmatprep.mubr.f32.mxu0 0.0
    %235 = vmatmul.mubr.f32.gmra.mrb[0].mxu0 %v82
    %v236 = vpop.f32.mrb[0].mxu0
    %v237 = vadd.f32 0.0, %v236
    %v238 = vpop.f32.mrb[0].mxu0
    %239 = vmatprep.mubr.f32.mxu0 0.0
    %240 = vmatmul.mubr.f32.gmra.mrb[0].mxu0 %v83
    %v241 = vpop.f32.mrb[0].mxu0
    %v242 = vadd.f32 0.0, %v241
    %v243 = vpop.f32.mrb[0].mxu0
    %244 = vdwg.mxu0
    %s245 = smul.u32 0, 128
    %s246 = sshra.s32 %s245, 7
    %s247 = sand.u32 %s245, 127
    %s248 = scalar_lea.vmem %s2, %s246
    %v249 = vld [vmem:[%s248] sm:$0x1]
    %s250 = scalar_lea.vmem %s3, %s246
    %v251 = vld [vmem:[%s250] sm:$0x1]
    %v252 = vadd.f32 %v167, %v172
    %v253 = vadd.f32 %v252, %v177
    %v254 = vadd.f32 %v253, %v182
    %v255 = vadd.f32 %v254, %v187
    %v256 = vadd.f32 %v255, %v192
    %v257 = vadd.f32 %v256, %v197
    %v258 = vadd.f32 %v257, %v202
    %v259 = vadd.f32 %v258, %v207
    %v260 = vadd.f32 %v259, %v212
    %v261 = vadd.f32 %v260, %v217
    %v262 = vadd.f32 %v261, %v222
    %v263 = vadd.f32 %v262, %v227
    %v264 = vadd.f32 %v263, %v232
    %v265 = vadd.f32 %v264, %v237
    %v266 = vadd.f32 %v265, %v242
    %v267 = vrot.slane %v266, 4
    %v268 = vadd.f32 %v266, %v267
    %v269 = vrot.slane %v268, 2
    %v270 = vadd.f32 %v268, %v269
    %v271 = vrot.slane %v270, 1
    %v272 = vadd.f32 %v270, %v271
    %v273 = vmul.f32 %v167, %v167
    %v274 = vmul.f32 %v172, %v172
    %v275 = vmul.f32 %v177, %v177
    %v276 = vmul.f32 %v182, %v182
    %v277 = vmul.f32 %v187, %v187
    %v278 = vmul.f32 %v192, %v192
    %v279 = vmul.f32 %v197, %v197
    %v280 = vmul.f32 %v202, %v202
    %v281 = vmul.f32 %v207, %v207
    %v282 = vmul.f32 %v212, %v212
    %v283 = vmul.f32 %v217, %v217
    %v284 = vmul.f32 %v222, %v222
    %v285 = vmul.f32 %v227, %v227
    %v286 = vmul.f32 %v232, %v232
    %v287 = vmul.f32 %v237, %v237
    %v288 = vmul.f32 %v242, %v242
    %v289 = vadd.f32 %v273, %v274
    %v290 = vadd.f32 %v289, %v275
    %v291 = vadd.f32 %v290, %v276
    %v292 = vadd.f32 %v291, %v277
    %v293 = vadd.f32 %v292, %v278
    %v294 = vadd.f32 %v293, %v279
    %v295 = vadd.f32 %v294, %v280
    %v296 = vadd.f32 %v295, %v281
    %v297 = vadd.f32 %v296, %v282
    %v298 = vadd.f32 %v297, %v283
    %v299 = vadd.f32 %v298, %v284
    %v300 = vadd.f32 %v299, %v285
    %v301 = vadd.f32 %v300, %v286
    %v302 = vadd.f32 %v301, %v287
    %v303 = vadd.f32 %v302, %v288
    %v304 = vrot.slane %v303, 4
    %v305 = vadd.f32 %v303, %v304
    %v306 = vrot.slane %v305, 2
    %v307 = vadd.f32 %v305, %v306
    %v308 = vrot.slane %v307, 1
    %v309 = vadd.f32 %v307, %v308
    %v310 = vmul.f32 %v272, 0.0078125
    %v311 = vmul.f32 %v309, 0.0078125
    %v312 = vmul.f32 %v310, %v310
    %v313 = vsub.f32 %v311, %v312
    %v314 = vmax.f32 %v313, 0.0
    %v315 = vadd.f32 %v314, 1e-05
    %v316 = vrsqrt.pop %v315
    %v317 = vmul.f32 %v249, %v316
    %v318 = vmul.f32 %v310, %v317
    %v319 = vsub.f32 %v251, %v318
    %v321 = vlaneseq
    %v322 = vshrl.u32 %v321, 7
    %v323 = vsub.s32 0, %v322
    %v324 = vrot.slane %v317, %v323
    %v326 = vmul.f32 %v167, %v324
    %v327 = vmul.f32 %v172, %v324
    %v328 = vmul.f32 %v177, %v324
    %v329 = vmul.f32 %v182, %v324
    %v330 = vmul.f32 %v187, %v324
    %v331 = vmul.f32 %v192, %v324
    %v332 = vmul.f32 %v197, %v324
    %v333 = vmul.f32 %v202, %v324
    %v334 = vmul.f32 %v207, %v324
    %v335 = vmul.f32 %v212, %v324
    %v336 = vmul.f32 %v217, %v324
    %v337 = vmul.f32 %v222, %v324
    %v338 = vmul.f32 %v227, %v324
    %v339 = vmul.f32 %v232, %v324
    %v340 = vmul.f32 %v237, %v324
    %v341 = vmul.f32 %v242, %v324
    %v343 = vlaneseq
    %v344 = vshrl.u32 %v343, 7
    %v345 = vsub.s32 0, %v344
    %v346 = vrot.slane %v319, %v345
    %v348 = vadd.f32 %v326, %v346
    %v349 = vadd.f32 %v327, %v346
    %v350 = vadd.f32 %v328, %v346
    %v351 = vadd.f32 %v329, %v346
    %v352 = vadd.f32 %v330, %v346
    %v353 = vadd.f32 %v331, %v346
    %v354 = vadd.f32 %v332, %v346
    %v355 = vadd.f32 %v333, %v346
    %v356 = vadd.f32 %v334, %v346
    %v357 = vadd.f32 %v335, %v346
    %v358 = vadd.f32 %v336, %v346
    %v359 = vadd.f32 %v337, %v346
    %v360 = vadd.f32 %v338, %v346
    %v361 = vadd.f32 %v339, %v346
    %v362 = vadd.f32 %v340, %v346
    %v363 = vadd.f32 %v341, %v346
    %v364 = vmax.f32 %v348, 0.0
    %v365 = vmax.f32 %v349, 0.0
    %v366 = vmax.f32 %v350, 0.0
    %v367 = vmax.f32 %v351, 0.0
    %v368 = vmax.f32 %v352, 0.0
    %v369 = vmax.f32 %v353, 0.0
    %v370 = vmax.f32 %v354, 0.0
    %v371 = vmax.f32 %v355, 0.0
    %v372 = vmax.f32 %v356, 0.0
    %v373 = vmax.f32 %v357, 0.0
    %v374 = vmax.f32 %v358, 0.0
    %v375 = vmax.f32 %v359, 0.0
    %v376 = vmax.f32 %v360, 0.0
    %v377 = vmax.f32 %v361, 0.0
    %v378 = vmax.f32 %v362, 0.0
    %v379 = vmax.f32 %v363, 0.0
    %v380 = vld [vmem:[#allocation7] sm:$0xff]
    %v381 = vld [vmem:[#allocation7 + $0x8] sm:$0xff]
    %v382 = vld [vmem:[#allocation7 + $0x10] sm:$0xff]
    %v383 = vld [vmem:[#allocation7 + $0x18] sm:$0xff]
    %v384 = vld [vmem:[#allocation7 + $0x20] sm:$0xff]
    %v385 = vld [vmem:[#allocation7 + $0x28] sm:$0xff]
    %v386 = vld [vmem:[#allocation7 + $0x30] sm:$0xff]
    %v387 = vld [vmem:[#allocation7 + $0x38] sm:$0xff]
    %v388 = vld [vmem:[#allocation7 + $0x40] sm:$0xff]
    %v389 = vld [vmem:[#allocation7 + $0x48] sm:$0xff]
    %v390 = vld [vmem:[#allocation7 + $0x50] sm:$0xff]
    %v391 = vld [vmem:[#allocation7 + $0x58] sm:$0xff]
    %v392 = vld [vmem:[#allocation7 + $0x60] sm:$0xff]
    %v393 = vld [vmem:[#allocation7 + $0x68] sm:$0xff]
    %v394 = vld [vmem:[#allocation7 + $0x70] sm:$0xff]
    %v395 = vld [vmem:[#allocation7 + $0x78] sm:$0xff]
    %396 = vmatprep.subr.mxu0 0.0
    %397 = vmatpush1.msra.mxu0 %v380
    %398 = vmatprep.subr.mxu0 0.0
    %399 = vmatpush1.msra.mxu0 %v381
    %400 = vmatprep.subr.mxu0 0.0
    %401 = vmatpush1.msra.mxu0 %v382
    %402 = vmatprep.subr.mxu0 0.0
    %403 = vmatpush1.msra.mxu0 %v383
    %404 = vmatprep.subr.mxu0 0.0
    %405 = vmatpush1.msra.mxu0 %v384
    %406 = vmatprep.subr.mxu0 0.0
    %407 = vmatpush1.msra.mxu0 %v385
    %408 = vmatprep.subr.mxu0 0.0
    %409 = vmatpush1.msra.mxu0 %v386
    %410 = vmatprep.subr.mxu0 0.0
    %411 = vmatpush1.msra.mxu0 %v387
    %412 = vmatprep.subr.mxu0 0.0
    %413 = vmatpush1.msra.mxu0 %v388
    %414 = vmatprep.subr.mxu0 0.0
    %415 = vmatpush1.msra.mxu0 %v389
    %416 = vmatprep.subr.mxu0 0.0
    %417 = vmatpush1.msra.mxu0 %v390
    %418 = vmatprep.subr.mxu0 0.0
    %419 = vmatpush1.msra.mxu0 %v391
    %420 = vmatprep.subr.mxu0 0.0
    %421 = vmatpush1.msra.mxu0 %v392
    %422 = vmatprep.subr.mxu0 0.0
    %423 = vmatpush1.msra.mxu0 %v393
    %424 = vmatprep.subr.mxu0 0.0
    %425 = vmatpush1.msra.mxu0 %v394
    %426 = vmatprep.subr.mxu0 0.0
    %427 = vmatpush1.msra.mxu0 %v395
    %428 = vmatprep.subr.mxu0 0.0
    %429 = vmatpush1.msra.mxu0 0.0
    %430 = vmatprep.subr.mxu0 0.0
    %431 = vmatpush1.msra.mxu0 0.0
    %432 = vmatprep.subr.mxu0 0.0
    %433 = vmatpush1.msra.mxu0 0.0
    %434 = vmatprep.subr.mxu0 0.0
    %435 = vmatpush1.msra.mxu0 0.0
    %436 = vmatprep.subr.mxu0 0.0
    %437 = vmatpush1.msra.mxu0 0.0
    %438 = vmatprep.subr.mxu0 0.0
    %439 = vmatpush1.msra.mxu0 0.0
    %440 = vmatprep.subr.mxu0 0.0
    %441 = vmatpush1.msra.mxu0 0.0
    %442 = vmatprep.subr.mxu0 0.0
    %443 = vmatpush1.msra.mxu0 0.0
    %444 = vmatprep.subr.mxu0 0.0
    %445 = vmatpush1.msra.mxu0 0.0
    %446 = vmatprep.subr.mxu0 0.0
    %447 = vmatpush1.msra.mxu0 0.0
    %448 = vmatprep.subr.mxu0 0.0
    %449 = vmatpush1.msra.mxu0 0.0
    %450 = vmatprep.subr.mxu0 0.0
    %451 = vmatpush1.msra.mxu0 0.0
    %452 = vmatprep.subr.mxu0 0.0
    %453 = vmatpush1.msra.mxu0 0.0
    %454 = vmatprep.subr.mxu0 0.0
    %455 = vmatpush1.msra.mxu0 0.0
    %456 = vmatprep.subr.mxu0 0.0
    %457 = vmatpush1.msra.mxu0 0.0
    %458 = vmatprep.subr.mxu0 0.0
    %459 = vmatpush1.msra.mxu0 0.0
    %460 = vmatprep.mubr.f32.mxu0 0.0
    %461 = vmatmul.mubr.f32.gmra.mrb[0].mxu0 %v364
    %v462 = vpop.f32.mrb[0].mxu0
    %v463 = vadd.f32 0.0, %v462
    %v464 = vpop.f32.mrb[0].mxu0
    %465 = vmatprep.mubr.f32.mxu0 0.0
    %466 = vmatmul.mubr.f32.gmra.mrb[0].mxu0 %v365
    %v467 = vpop.f32.mrb[0].mxu0
    %v468 = vadd.f32 0.0, %v467
    %v469 = vpop.f32.mrb[0].mxu0
    %470 = vmatprep.mubr.f32.mxu0 0.0
    %471 = vmatmul.mubr.f32.gmra.mrb[0].mxu0 %v366
    %v472 = vpop.f32.mrb[0].mxu0
    %v473 = vadd.f32 0.0, %v472
    %v474 = vpop.f32.mrb[0].mxu0
    %475 = vmatprep.mubr.f32.mxu0 0.0
    %476 = vmatmul.mubr.f32.gmra.mrb[0].mxu0 %v367
    %v477 = vpop.f32.mrb[0].mxu0
    %v478 = vadd.f32 0.0, %v477
    %v479 = vpop.f32.mrb[0].mxu0
    %480 = vmatprep.mubr.f32.mxu0 0.0
    %481 = vmatmul.mubr.f32.gmra.mrb[0].mxu0 %v368
    %v482 = vpop.f32.mrb[0].mxu0
    %v483 = vadd.f32 0.0, %v482
    %v484 = vpop.f32.mrb[0].mxu0
    %485 = vmatprep.mubr.f32.mxu0 0.0
    %486 = vmatmul.mubr.f32.gmra.mrb[0].mxu0 %v369
    %v487 = vpop.f32.mrb[0].mxu0
    %v488 = vadd.f32 0.0, %v487
    %v489 = vpop.f32.mrb[0].mxu0
    %490 = vmatprep.mubr.f32.mxu0 0.0
    %491 = vmatmul.mubr.f32.gmra.mrb[0].mxu0 %v370
    %v492 = vpop.f32.mrb[0].mxu0
    %v493 = vadd.f32 0.0, %v492
    %v494 = vpop.f32.mrb[0].mxu0
    %495 = vmatprep.mubr.f32.mxu0 0.0
    %496 = vmatmul.mubr.f32.gmra.mrb[0].mxu0 %v371
    %v497 = vpop.f32.mrb[0].mxu0
    %v498 = vadd.f32 0.0, %v497
    %v499 = vpop.f32.mrb[0].mxu0
    %500 = vmatprep.mubr.f32.mxu0 0.0
    %501 = vmatmul.mubr.f32.gmra.mrb[0].mxu0 %v372
    %v502 = vpop.f32.mrb[0].mxu0
    %v503 = vadd.f32 0.0, %v502
    %v504 = vpop.f32.mrb[0].mxu0
    %505 = vmatprep.mubr.f32.mxu0 0.0
    %506 = vmatmul.mubr.f32.gmra.mrb[0].mxu0 %v373
    %v507 = vpop.f32.mrb[0].mxu0
    %v508 = vadd.f32 0.0, %v507
    %v509 = vpop.f32.mrb[0].mxu0
    %510 = vmatprep.mubr.f32.mxu0 0.0
    %511 = vmatmul.mubr.f32.gmra.mrb[0].mxu0 %v374
    %v512 = vpop.f32.mrb[0].mxu0
    %v513 = vadd.f32 0.0, %v512
    %v514 = vpop.f32.mrb[0].mxu0
    %515 = vmatprep.mubr.f32.mxu0 0.0
    %516 = vmatmul.mubr.f32.gmra.mrb[0].mxu0 %v375
    %v517 = vpop.f32.mrb[0].mxu0
    %v518 = vadd.f32 0.0, %v517
    %v519 = vpop.f32.mrb[0].mxu0
    %520 = vmatprep.mubr.f32.mxu0 0.0
    %521 = vmatmul.mubr.f32.gmra.mrb[0].mxu0 %v376
    %v522 = vpop.f32.mrb[0].mxu0
    %v523 = vadd.f32 0.0, %v522
    %v524 = vpop.f32.mrb[0].mxu0
    %525 = vmatprep.mubr.f32.mxu0 0.0
    %526 = vmatmul.mubr.f32.gmra.mrb[0].mxu0 %v377
    %v527 = vpop.f32.mrb[0].mxu0
    %v528 = vadd.f32 0.0, %v527
    %v529 = vpop.f32.mrb[0].mxu0
    %530 = vmatprep.mubr.f32.mxu0 0.0
    %531 = vmatmul.mubr.f32.gmra.mrb[0].mxu0 %v378
    %v532 = vpop.f32.mrb[0].mxu0
    %v533 = vadd.f32 0.0, %v532
    %v534 = vpop.f32.mrb[0].mxu0
    %535 = vmatprep.mubr.f32.mxu0 0.0
    %536 = vmatmul.mubr.f32.gmra.mrb[0].mxu0 %v379
    %v537 = vpop.f32.mrb[0].mxu0
    %v538 = vadd.f32 0.0, %v537
    %v539 = vpop.f32.mrb[0].mxu0
    %540 = vdwg.mxu0
    %v541 = vadd.f32 %v463, %v468
    %v542 = vadd.f32 %v541, %v473
    %v543 = vadd.f32 %v542, %v478
    %v544 = vadd.f32 %v543, %v483
    %v545 = vadd.f32 %v544, %v488
    %v546 = vadd.f32 %v545, %v493
    %v547 = vadd.f32 %v546, %v498
    %v548 = vadd.f32 %v547, %v503
    %v549 = vadd.f32 %v548, %v508
    %v550 = vadd.f32 %v549, %v513
    %v551 = vadd.f32 %v550, %v518
    %v552 = vadd.f32 %v551, %v523
    %v553 = vadd.f32 %v552, %v528
    %v554 = vadd.f32 %v553, %v533
    %v555 = vadd.f32 %v554, %v538
    %v556 = vrot.slane %v555, 4
    %v557 = vadd.f32 %v555, %v556
    %v558 = vrot.slane %v557, 2
    %v559 = vadd.f32 %v557, %v558
    %v560 = vrot.slane %v559, 1
    %v561 = vadd.f32 %v559, %v560
    %v562 = vmul.f32 %v463, %v463
    %v563 = vmul.f32 %v468, %v468
    %v564 = vmul.f32 %v473, %v473
    %v565 = vmul.f32 %v478, %v478
    %v566 = vmul.f32 %v483, %v483
    %v567 = vmul.f32 %v488, %v488
    %v568 = vmul.f32 %v493, %v493
    %v569 = vmul.f32 %v498, %v498
    %v570 = vmul.f32 %v503, %v503
    %v571 = vmul.f32 %v508, %v508
    %v572 = vmul.f32 %v513, %v513
    %v573 = vmul.f32 %v518, %v518
    %v574 = vmul.f32 %v523, %v523
    %v575 = vmul.f32 %v528, %v528
    %v576 = vmul.f32 %v533, %v533
    %v577 = vmul.f32 %v538, %v538
    %v578 = vadd.f32 %v562, %v563
    %v579 = vadd.f32 %v578, %v564
    %v580 = vadd.f32 %v579, %v565
    %v581 = vadd.f32 %v580, %v566
    %v582 = vadd.f32 %v581, %v567
    %v583 = vadd.f32 %v582, %v568
    %v584 = vadd.f32 %v583, %v569
    %v585 = vadd.f32 %v584, %v570
    %v586 = vadd.f32 %v585, %v571
    %v587 = vadd.f32 %v586, %v572
    %v588 = vadd.f32 %v587, %v573
    %v589 = vadd.f32 %v588, %v574
    %v590 = vadd.f32 %v589, %v575
    %v591 = vadd.f32 %v590, %v576
    %v592 = vadd.f32 %v591, %v577
    %v593 = vrot.slane %v592, 4
    %v594 = vadd.f32 %v592, %v593
    %v595 = vrot.slane %v594, 2
    %v596 = vadd.f32 %v594, %v595
    %v597 = vrot.slane %v596, 1
    %v598 = vadd.f32 %v596, %v597
    %v599 = vmul.f32 %v561, 0.0078125
    %v600 = vmul.f32 %v598, 0.0078125
    %v601 = vmul.f32 %v599, %v599
    %v602 = vsub.f32 %v600, %v601
    %v603 = vmax.f32 %v602, 0.0
    %v604 = vld [vmem:[%s5] sm:$0x1]
    %v605 = vadd.f32 %v603, 1e-05
    %v606 = vrsqrt.pop %v605
    %v607 = vmul.f32 %v604, %v606
    %v608 = vld [vmem:[%s6] sm:$0x1]
    %v609 = vmul.f32 %v599, %v607
    %v610 = vsub.f32 %v608, %v609
    %v612 = vlaneseq
    %v613 = vshrl.u32 %v612, 7
    %v614 = vsub.s32 0, %v613
    %v615 = vrot.slane %v607, %v614
    %v617 = vmul.f32 %v463, %v615
    %v618 = vmul.f32 %v468, %v615
    %v619 = vmul.f32 %v473, %v615
    %v620 = vmul.f32 %v478, %v615
    %v621 = vmul.f32 %v483, %v615
    %v622 = vmul.f32 %v488, %v615
    %v623 = vmul.f32 %v493, %v615
    %v624 = vmul.f32 %v498, %v615
    %v625 = vmul.f32 %v503, %v615
    %v626 = vmul.f32 %v508, %v615
    %v627 = vmul.f32 %v513, %v615
    %v628 = vmul.f32 %v518, %v615
    %v629 = vmul.f32 %v523, %v615
    %v630 = vmul.f32 %v528, %v615
    %v631 = vmul.f32 %v533, %v615
    %v632 = vmul.f32 %v538, %v615
    %v634 = vlaneseq
    %v635 = vshrl.u32 %v634, 7
    %v636 = vsub.s32 0, %v635
    %v637 = vrot.slane %v610, %v636
    %v639 = vadd.f32 %v617, %v637
    %v640 = vadd.f32 %v618, %v637
    %v641 = vadd.f32 %v619, %v637
    %v642 = vadd.f32 %v620, %v637
    %v643 = vadd.f32 %v621, %v637
    %v644 = vadd.f32 %v622, %v637
    %v645 = vadd.f32 %v623, %v637
    %v646 = vadd.f32 %v624, %v637
    %v647 = vadd.f32 %v625, %v637
    %v648 = vadd.f32 %v626, %v637
    %v649 = vadd.f32 %v627, %v637
    %v650 = vadd.f32 %v628, %v637
    %v651 = vadd.f32 %v629, %v637
    %v652 = vadd.f32 %v630, %v637
    %v653 = vadd.f32 %v631, %v637
    %v654 = vadd.f32 %v632, %v637
    %v655 = vadd.f32 %v639, %v68
    %v656 = vadd.f32 %v640, %v69
    %v657 = vadd.f32 %v641, %v70
    %v658 = vadd.f32 %v642, %v71
    %v659 = vadd.f32 %v643, %v72
    %v660 = vadd.f32 %v644, %v73
    %v661 = vadd.f32 %v645, %v74
    %v662 = vadd.f32 %v646, %v75
    %v663 = vadd.f32 %v647, %v76
    %v664 = vadd.f32 %v648, %v77
    %v665 = vadd.f32 %v649, %v78
    %v666 = vadd.f32 %v650, %v79
    %v667 = vadd.f32 %v651, %v80
    %v668 = vadd.f32 %v652, %v81
    %v669 = vadd.f32 %v653, %v82
    %v670 = vadd.f32 %v654, %v83
    %v671 = vmax.f32 %v655, 0.0
    %v672 = vmax.f32 %v656, 0.0
    %v673 = vmax.f32 %v657, 0.0
    %v674 = vmax.f32 %v658, 0.0
    %v675 = vmax.f32 %v659, 0.0
    %v676 = vmax.f32 %v660, 0.0
    %v677 = vmax.f32 %v661, 0.0
    %v678 = vmax.f32 %v662, 0.0
    %v679 = vmax.f32 %v663, 0.0
    %v680 = vmax.f32 %v664, 0.0
    %v681 = vmax.f32 %v665, 0.0
    %v682 = vmax.f32 %v666, 0.0
    %v683 = vmax.f32 %v667, 0.0
    %v684 = vmax.f32 %v668, 0.0
    %v685 = vmax.f32 %v669, 0.0
    %v686 = vmax.f32 %v670, 0.0
    %687 = vst [vmem:[#allocation8] sm:$0xff] %v671
    %688 = vst [vmem:[#allocation8 + $0x8] sm:$0xff] %v672
    %689 = vst [vmem:[#allocation8 + $0x10] sm:$0xff] %v673
    %690 = vst [vmem:[#allocation8 + $0x18] sm:$0xff] %v674
    %691 = vst [vmem:[#allocation8 + $0x20] sm:$0xff] %v675
    %692 = vst [vmem:[#allocation8 + $0x28] sm:$0xff] %v676
    %693 = vst [vmem:[#allocation8 + $0x30] sm:$0xff] %v677
    %694 = vst [vmem:[#allocation8 + $0x38] sm:$0xff] %v678
    %695 = vst [vmem:[#allocation8 + $0x40] sm:$0xff] %v679
    %696 = vst [vmem:[#allocation8 + $0x48] sm:$0xff] %v680
    %697 = vst [vmem:[#allocation8 + $0x50] sm:$0xff] %v681
    %698 = vst [vmem:[#allocation8 + $0x58] sm:$0xff] %v682
    %699 = vst [vmem:[#allocation8 + $0x60] sm:$0xff] %v683
    %700 = vst [vmem:[#allocation8 + $0x68] sm:$0xff] %v684
    %701 = vst [vmem:[#allocation8 + $0x70] sm:$0xff] %v685
    %702 = vst [vmem:[#allocation8 + $0x78] sm:$0xff] %v686
    // Predicated region
    $region42: #{tpu_custom_call.1} parent=1 // pred_check
      _
    $region43: #{tpu_custom_call.1} parent=1 // pred_check_branch
      %704 = sbr.rel (0) target = $region45
    $region44: #{tpu_custom_call.1} parent=1 // pred_region
      %s706 = ssub.s32 2048, 2048
      %707 = vsyncadd [#allocation4], %s706
      %s708 = sshll.u32 [#allocation8], 4
      %s709 = int_to_ptr.vmem [resolvable:$true] %s708
      %714 = dma.vmem_to_hbm [thread:$0]  %s709, 2048, %s7, [#allocation4], 128, 128, 8
    $region45: #{tpu_custom_call.1} parent=1 // pred_fallthru
      _
    // Predicated region
    $region46: #{tpu_custom_call.1} parent=1 // pred_check
      _
    $region47: #{tpu_custom_call.1} parent=1 // pred_check_branch
      %716 = sbr.rel (0) target = $region49
    $region48: #{tpu_custom_call.1} parent=1 // pred_region
      %717 = dma.done [#allocation4], 2048
    $region49: #{tpu_custom_call.1} parent=1 // pred_fallthru
      _
    %718 = vsyncpa [#allocation3], 1
    %719 = vsyncpa [#allocation6], 1
    %720 = vsyncpa [#allocation4], 1

</llo_original>
